<compile_context>
chip_gen: v7x
topology: tpu7x:2x2x1
jax: 0.10.0
libtpu: 0.0.40
codegen_flags: <defaults>
</compile_context>

<pallas_src>
import functools

import jax
import jax.numpy as jnp
from jax.experimental import pallas as pl
from jax.experimental.pallas import tpu as pltpu


def _round_up(x, m):
    return ((x + m - 1) // m) * m


def _decoder_kernel(num_layers, x_ref, *refs):
    """refs = (W0, b0, W1, b1, ..., W_{L-1}, b_{L-1}, out_ref)."""
    out_ref = refs[-1]
    param_refs = refs[:-1]

    h = x_ref[...]
    for i in range(num_layers):
        w = param_refs[2 * i][...]
        b = param_refs[2 * i + 1][...]          # (1, dout)
        # Native-dtype MXU operands (bf16 weights stay bf16), f32 accumulation.
        h = jnp.dot(h.astype(w.dtype), w, preferred_element_type=jnp.float32)
        h = h + b.astype(jnp.float32)
        if i < num_layers - 1:                  # hidden layers -> ReLU
            h = jnp.maximum(h, 0.0)
        # last layer -> Identity
    out_ref[...] = h.astype(out_ref.dtype)


def decoder_forward(x, params, *, tile_n=8192):
    """Run the Decoder MLP on x: [N, F] with params = [(W[in,out], b[out]), ...]."""
    N, F = x.shape
    num_layers = len(params)
    out_size = params[-1][0].shape[1]
    itemsize = x.dtype.itemsize

    # --- flatten params; whole (small) weights/biases replicated into VMEM ---
    flat_params = []
    param_specs = []
    param_bytes = 0
    max_w_pad = 0
    flops = 0
    for (w, b) in params:
        din, dout = w.shape
        b2 = b.reshape(1, dout)
        flat_params.append(w)
        flat_params.append(b2)
        param_specs.append(pl.BlockSpec((din, dout), lambda i: (0, 0)))
        param_specs.append(pl.BlockSpec((1, dout), lambda i: (0, 0)))
        param_bytes += w.size * w.dtype.itemsize + b.size * b.dtype.itemsize
        max_w_pad = max(max_w_pad, _round_up(dout, 128))
        flops += 2 * N * din * dout

    # --- generation-aware VMEM budget (v5e/v6e: 128 MiB, v7x: 64 MiB/TC) ---
    try:
        info = pltpu.get_tpu_info()
        vmem_cap = int(getattr(info, "vmem_capacity_bytes", 64 << 20))
    except Exception:
        vmem_cap = 64 << 20                      # conservative (v7x per-core)
    limit_cap = (vmem_cap * 3) // 4

    # Per-row VMEM footprint: double-buffered input + output tiles plus f32
    # hidden-activation slabs (lane-padded width), so wide MLPs can't OOM/spill.
    bytes_per_row = (2 * F * itemsize + 2 * out_size * itemsize
                     + 2 * max_w_pad * 4)
    headroom = 1 << 20
    avail = max(0, limit_cap - 2 * param_bytes - headroom)
    row_budget = max(8, (avail // bytes_per_row) // 8 * 8)

    # --- node tile: large (amortize step overhead), 8-aligned, capped so the
    #     grid has >= 2 steps (v7x megacore) and the tile fits the VMEM budget.
    tile = max(8, min(_round_up(min(tile_n, pl.cdiv(N, 2)), 8), row_budget))
    grid = (pl.cdiv(N, tile),)                   # ragged last block is masked

    # --- cost hint for XLA scheduling around the custom call ---
    bytes_accessed = (N * F * itemsize            # x read
                      + N * out_size * itemsize   # y write
                      + param_bytes)              # weights/biases
    cost = pl.CostEstimate(flops=flops, transcendentals=0,
                           bytes_accessed=bytes_accessed)

    # --- only raise the scoped VMEM limit when the tile actually needs it ---
    vmem_needed = tile * bytes_per_row + 2 * param_bytes + headroom
    compiler_kwargs = dict(dimension_semantics=("parallel",))
    if vmem_needed > (16 << 20):                  # v5e scoped default; v6e/v7x: 32 MiB
        compiler_kwargs["vmem_limit_bytes"] = int(min(2 * vmem_needed, limit_cap))

    kernel = functools.partial(_decoder_kernel, num_layers)

    out = pl.pallas_call(
        kernel,
        out_shape=jax.ShapeDtypeStruct((N, out_size), x.dtype),
        grid_spec=pltpu.PrefetchScalarGridSpec(
            num_scalar_prefetch=0,
            grid=grid,
            in_specs=[pl.BlockSpec((tile, F), lambda i: (i, 0))] + param_specs,
            out_specs=pl.BlockSpec((tile, out_size), lambda i: (i, 0)),
        ),
        compiler_params=pltpu.CompilerParams(**compiler_kwargs),
        cost_estimate=cost,
    )(x, *flat_params)

    return out


def init_decoder_params(key, num_encoded_node_features, output_node_size,
                        num_mlp_layers, mlp_layer_size):
    """Deterministic init mirroring build_mlp layer sizes.

    Weights stored as [in_features, out_features] (so kernel does x @ W + b,
    equivalent to PyTorch's x @ W.T with its [out, in] storage)."""
    layer_sizes = ([num_encoded_node_features]
                   + [mlp_layer_size] * num_mlp_layers
                   + [output_node_size])
    params = []
    for i in range(len(layer_sizes) - 1):
        din, dout = layer_sizes[i], layer_sizes[i + 1]
        key, kw, kb = jax.random.split(key, 3)
        bound = 1.0 / jnp.sqrt(jnp.float32(din))   # nn.Linear default init
        w = jax.random.uniform(kw, (din, dout), jnp.float32, -bound, bound)
        b = jax.random.uniform(kb, (dout,), jnp.float32, -bound, bound)
        params.append((w, b))
    return params


def decoder_reference(x, params):
    """Pure-JAX reference of the same MLP."""
    h = x
    for i, (w, b) in enumerate(params):
        h = h @ w + b
        if i < len(params) - 1:
            h = jnp.maximum(h, 0.0)
    return h


if __name__ == "__main__":
    # Small, module-consistent shapes.
    num_encoded_node_features = 32
    output_node_size = 3
    num_mlp_layers = 2
    mlp_layer_size = 32

    key = jax.random.PRNGKey(0)
    key, kx1, kx2 = jax.random.split(key, 3)
    params = init_decoder_params(key, num_encoded_node_features,
                                 output_node_size, num_mlp_layers,
                                 mlp_layer_size)

    # Case 1: default (large) tile is clamped to ~N/2; ragged final block.
    x1 = jax.random.normal(kx1, (200, num_encoded_node_features),
                           dtype=jnp.float32)
    y1 = jax.block_until_ready(decoder_forward(x1, params))
    assert y1.shape == (200, output_node_size)
    assert jnp.allclose(y1, decoder_reference(x1, params), atol=1e-5, rtol=1e-5)

    # Case 2: multi-step grid with a small tile and a non-8-multiple remainder
    # in the last block (exercises Pallas' masked boundary handling).
    x2 = jax.random.normal(kx2, (523, num_encoded_node_features),
                           dtype=jnp.float32)
    y2 = jax.block_until_ready(decoder_forward(x2, params, tile_n=128))
    assert y2.shape == (523, output_node_size)
    assert jnp.allclose(y2, decoder_reference(x2, params), atol=1e-5, rtol=1e-5)

    print("KERNEL_OK")
</pallas_src>

<mosaic_0001>
module attributes {stable_mosaic.version = 11 : i64} {
  func.func @_decoder_kernel(%arg0: i32, %arg1: memref<104x32xf32, #tpu.memory_space<vmem>>, %arg2: memref<32x32xf32, #tpu.memory_space<vmem>>, %arg3: memref<1x32xf32, #tpu.memory_space<vmem>>, %arg4: memref<32x32xf32, #tpu.memory_space<vmem>>, %arg5: memref<1x32xf32, #tpu.memory_space<vmem>>, %arg6: memref<32x3xf32, #tpu.memory_space<vmem>>, %arg7: memref<1x3xf32, #tpu.memory_space<vmem>>, %arg8: memref<104x3xf32, #tpu.memory_space<vmem>>) attributes {dimension_semantics = [#tpu.dimension_semantics<parallel>], iteration_bounds = array<i64: 2>, scalar_prefetch = 0 : i64, scratch_operands = 0 : i64, tpu.core_type = #tpu.core_type<tc>, window_params = [{transform_indices = @transform_0, window_bounds = array<i64: 104, 32>}, {pipeline_mode = #tpu.pipeline_mode<synchronous>, transform_indices = @transform_1, window_bounds = array<i64: 32, 32>}, {pipeline_mode = #tpu.pipeline_mode<synchronous>, transform_indices = @transform_2, window_bounds = array<i64: 1, 32>}, {pipeline_mode = #tpu.pipeline_mode<synchronous>, transform_indices = @transform_3, window_bounds = array<i64: 32, 32>}, {pipeline_mode = #tpu.pipeline_mode<synchronous>, transform_indices = @transform_4, window_bounds = array<i64: 1, 32>}, {pipeline_mode = #tpu.pipeline_mode<synchronous>, transform_indices = @transform_5, window_bounds = array<i64: 32, 3>}, {pipeline_mode = #tpu.pipeline_mode<synchronous>, transform_indices = @transform_6, window_bounds = array<i64: 1, 3>}, {transform_indices = @transform_7, window_bounds = array<i64: 104, 3>}]} {
    %c0 = arith.constant 0 : index
    %c0_0 = arith.constant 0 : index
    %0 = vector.load %arg1[%c0, %c0_0] : memref<104x32xf32, #tpu.memory_space<vmem>>, vector<104x32xf32>
    %c0_1 = arith.constant 0 : index
    %c0_2 = arith.constant 0 : index
    %1 = vector.load %arg2[%c0_1, %c0_2] : memref<32x32xf32, #tpu.memory_space<vmem>>, vector<32x32xf32>
    %c0_3 = arith.constant 0 : index
    %c0_4 = arith.constant 0 : index
    %2 = vector.load %arg3[%c0_3, %c0_4] : memref<1x32xf32, #tpu.memory_space<vmem>>, vector<1x32xf32>
    %cst = arith.constant dense<0.000000e+00> : vector<104x32xf32>
    %3 = tpu.matmul %0, %1, %cst {dimension_numbers = #tpu.dot_dimension_numbers<[1], [0], [0], [1], [0, 0, 1, 1], [], []>} : vector<104x32xf32>, vector<32x32xf32>, vector<104x32xf32> -> vector<104x32xf32>
    %4 = vector.broadcast %2 : vector<1x32xf32> to vector<104x32xf32>
    %5 = arith.addf %3, %4 : vector<104x32xf32>
    %cst_5 = arith.constant 0.000000e+00 : f32
    %6 = vector.broadcast %cst_5 : f32 to vector<104x32xf32>
    %7 = arith.maximumf %5, %6 : vector<104x32xf32>
    %c0_6 = arith.constant 0 : index
    %c0_7 = arith.constant 0 : index
    %8 = vector.load %arg4[%c0_6, %c0_7] : memref<32x32xf32, #tpu.memory_space<vmem>>, vector<32x32xf32>
    %c0_8 = arith.constant 0 : index
    %c0_9 = arith.constant 0 : index
    %9 = vector.load %arg5[%c0_8, %c0_9] : memref<1x32xf32, #tpu.memory_space<vmem>>, vector<1x32xf32>
    %cst_10 = arith.constant dense<0.000000e+00> : vector<104x32xf32>
    %10 = tpu.matmul %7, %8, %cst_10 {dimension_numbers = #tpu.dot_dimension_numbers<[1], [0], [0], [1], [0, 0, 1, 1], [], []>} : vector<104x32xf32>, vector<32x32xf32>, vector<104x32xf32> -> vector<104x32xf32>
    %11 = vector.broadcast %9 : vector<1x32xf32> to vector<104x32xf32>
    %12 = arith.addf %10, %11 : vector<104x32xf32>
    %cst_11 = arith.constant 0.000000e+00 : f32
    %13 = vector.broadcast %cst_11 : f32 to vector<104x32xf32>
    %14 = arith.maximumf %12, %13 : vector<104x32xf32>
    %c0_12 = arith.constant 0 : index
    %c0_13 = arith.constant 0 : index
    %15 = vector.load %arg6[%c0_12, %c0_13] : memref<32x3xf32, #tpu.memory_space<vmem>>, vector<32x3xf32>
    %c0_14 = arith.constant 0 : index
    %c0_15 = arith.constant 0 : index
    %16 = vector.load %arg7[%c0_14, %c0_15] : memref<1x3xf32, #tpu.memory_space<vmem>>, vector<1x3xf32>
    %cst_16 = arith.constant dense<0.000000e+00> : vector<104x3xf32>
    %17 = tpu.matmul %14, %15, %cst_16 {dimension_numbers = #tpu.dot_dimension_numbers<[1], [0], [0], [1], [0, 0, 1, 1], [], []>} : vector<104x32xf32>, vector<32x3xf32>, vector<104x3xf32> -> vector<104x3xf32>
    %18 = vector.broadcast %16 : vector<1x3xf32> to vector<104x3xf32>
    %19 = arith.addf %17, %18 : vector<104x3xf32>
    %c0_17 = arith.constant 0 : index
    %c0_18 = arith.constant 0 : index
    %20 = vector.load %arg8[%c0_17, %c0_18] : memref<104x3xf32, #tpu.memory_space<vmem>>, vector<104x3xf32>
    tpu.vector_store %arg8[%c0_17, %c0_18], %19 {strides = array<i32>} : memref<104x3xf32, #tpu.memory_space<vmem>>, vector<104x3xf32>,
    return
  }
  func.func @transform_0(%arg0: i32) -> (i32, i32) {
    %c0_i32 = arith.constant 0 : i32
    %c0_i32_0 = arith.constant 0 : i32
    return %arg0, %c0_i32 : i32, i32
  }
  func.func @transform_1(%arg0: i32) -> (i32, i32) {
    %c0_i32 = arith.constant 0 : i32
    %c0_i32_0 = arith.constant 0 : i32
    %c0_i32_1 = arith.constant 0 : i32
    return %c0_i32, %c0_i32_0 : i32, i32
  }
  func.func @transform_2(%arg0: i32) -> (i32, i32) {
    %c0_i32 = arith.constant 0 : i32
    %c0_i32_0 = arith.constant 0 : i32
    %c0_i32_1 = arith.constant 0 : i32
    return %c0_i32, %c0_i32_0 : i32, i32
  }
  func.func @transform_3(%arg0: i32) -> (i32, i32) {
    %c0_i32 = arith.constant 0 : i32
    %c0_i32_0 = arith.constant 0 : i32
    %c0_i32_1 = arith.constant 0 : i32
    return %c0_i32, %c0_i32_0 : i32, i32
  }
  func.func @transform_4(%arg0: i32) -> (i32, i32) {
    %c0_i32 = arith.constant 0 : i32
    %c0_i32_0 = arith.constant 0 : i32
    %c0_i32_1 = arith.constant 0 : i32
    return %c0_i32, %c0_i32_0 : i32, i32
  }
  func.func @transform_5(%arg0: i32) -> (i32, i32) {
    %c0_i32 = arith.constant 0 : i32
    %c0_i32_0 = arith.constant 0 : i32
    %c0_i32_1 = arith.constant 0 : i32
    return %c0_i32, %c0_i32_0 : i32, i32
  }
  func.func @transform_6(%arg0: i32) -> (i32, i32) {
    %c0_i32 = arith.constant 0 : i32
    %c0_i32_0 = arith.constant 0 : i32
    %c0_i32_1 = arith.constant 0 : i32
    return %c0_i32, %c0_i32_0 : i32, i32
  }
  func.func @transform_7(%arg0: i32) -> (i32, i32) {
    %c0_i32 = arith.constant 0 : i32
    %c0_i32_0 = arith.constant 0 : i32
    return %arg0, %c0_i32 : i32, i32
  }
}

</mosaic_0001>

<llo_original>
// kernel: tpu_custom_call.1
$region0: #{tpu_custom_call.1}
  #allocation0 [shape = 'u32[]', space=smem, size = 0x4, offset = 0x4, fixed_abs, tag = 'smem constant byte address 0x4 - core index']
  #allocation1 [shape = 'u32[144,128]{1,0:T(1,128)}', space=vmem, size = 0x12000, scoped, tag = 'internal scratch']
  %s0 = inlined_call_operand.vmem [shape: f32[200,32], index: 0, kind: input, shape index: {}]
  %s1 = inlined_call_operand.vmem [shape: f32[32,32], index: 1, kind: input, shape index: {}]
  %s2 = inlined_call_operand.vmem [shape: f32[1,32], index: 2, kind: input, shape index: {}]
  %s3 = inlined_call_operand.vmem [shape: f32[32,32], index: 3, kind: input, shape index: {}]
  %s4 = inlined_call_operand.vmem [shape: f32[1,32], index: 4, kind: input, shape index: {}]
  %s5 = inlined_call_operand.vmem [shape: f32[32,3], index: 5, kind: input, shape index: {}]
  %s6 = inlined_call_operand.vmem [shape: f32[1,3], index: 6, kind: input, shape index: {}]
  %s7 = inlined_call_operand.vmem [shape: f32[200,3], index: 7, kind: output, shape index: {}]
  %s8 = sld [smem:[#allocation0]]
  $region109: #{tpu_custom_call.1} parent=0
    _
  %s10 = ssub.s32 1, %s8
  %s11 = scalar_select 0, %s10, %s8
  $region1: #{tpu_custom_call.1} parent=0
    #allocation2 [shape = 'u8[106496]{0}', space=vmem, size = 0x1a000, scoped, tag = 'output window, operand 0']
    loop: start=0, step=1, limit=4
    $region2: #{tpu_custom_call.1} parent=1 // loop_pre_header
      _
    $region3: #{tpu_custom_call.1} parent=1 // loop_header
      %s13 = sphi 0, %s17
      %p14 = scmp.ge.s32.totalorder %s13, 4
      %s23 = sphi 0, %s25
      %s26 = sphi 0, %s23
      %s27 = sphi 0, %s26
      %s43 = sphi 0, %s27
      %s47 = sphi 0, %s47
      %s49 = sphi 0, %s47
      %s50 = sphi 0, %s49
      %s64 = sphi 0, %s50
      %s68 = sphi 0, %s68
      %s70 = sphi 0, %s68
      %s71 = sphi 0, %s70
      %s85 = sphi 0, %s71
      %s89 = sphi 0, %s89
      %s91 = sphi 0, %s89
      %s92 = sphi 0, %s91
      %s106 = sphi 0, %s92
      %s110 = sphi 0, %s110
      %s112 = sphi 0, %s110
      %s113 = sphi 0, %s112
      %s127 = sphi 0, %s113
      %s131 = sphi 0, %s131
      %s133 = sphi 0, %s131
      %s134 = sphi 0, %s133
      %s148 = sphi 0, %s134
      %s152 = sphi 0, %s152
      %s154 = sphi 0, %s152
      %s155 = sphi 0, %s154
      %s169 = sphi 0, %s155
      %s175 = sphi 0, %s177
      %s178 = sphi 0, %s175
      %s179 = sphi 0, %s178
      %s195 = sphi 0, %s179
    $region4: #{tpu_custom_call.1} parent=1 // loop_header_branch
      %16 = sbr.rel (%p14) target = $region8
    $region5: #{tpu_custom_call.1} parent=1 // loop_body
      %s18 = ssub.s32 %s13, 1
      %s19 = ssub.s32 %s13, 2
      %s20 = sadd.s32 %s13, 1
      %s21 = ssub.s32 %s13, %s20
      %p22 = scmp.eq.s32.totalorder %s21, 0
      %s24 = sadd.s32 %s23, 1
      %s25 = scalar_select %p22, %s23, %s24
      %p28 = pneg %p22
      %p29 = scmp.eq.s32.totalorder %s13, 1
      %p30 = por %p28, %p29
      %p31 = scmp.ne.s32.totalorder %s23, %s26
      %p32 = scmp.eq.s32.totalorder %s13, 0
      %p33 = por %p31, %p32
      %p34 = scmp.ne.s32.totalorder %s23, %s26
      %p35 = scmp.eq.s32.totalorder %s18, 1
      %p36 = por %p34, %p35
      %p37 = scmp.ne.s32.totalorder %s26, %s27
      %p38 = scmp.eq.s32.totalorder %s18, 0
      %p39 = por %p37, %p38
      %p40 = scmp.ne.s32.totalorder %s26, %s27
      %p41 = scmp.eq.s32.totalorder %s19, 1
      %p42 = por %p40, %p41
      %p44 = scmp.ne.s32.totalorder %s27, %s43
      %p45 = scmp.eq.s32.totalorder %s19, 0
      %p46 = por %p44, %p45
      %s48 = sadd.s32 %s47, 1
      %p51 = scmp.eq.s32.totalorder %s13, 1
      %p52 = scmp.ne.s32.totalorder %s47, %s49
      %p53 = scmp.eq.s32.totalorder %s13, 0
      %p54 = por %p52, %p53
      %p55 = scmp.ne.s32.totalorder %s47, %s49
      %p56 = scmp.eq.s32.totalorder %s18, 1
      %p57 = por %p55, %p56
      %p58 = scmp.ne.s32.totalorder %s49, %s50
      %p59 = scmp.eq.s32.totalorder %s18, 0
      %p60 = por %p58, %p59
      %p61 = scmp.ne.s32.totalorder %s49, %s50
      %p62 = scmp.eq.s32.totalorder %s19, 1
      %p63 = por %p61, %p62
      %p65 = scmp.ne.s32.totalorder %s50, %s64
      %p66 = scmp.eq.s32.totalorder %s19, 0
      %p67 = por %p65, %p66
      %s69 = sadd.s32 %s68, 1
      %p72 = scmp.eq.s32.totalorder %s13, 1
      %p73 = scmp.ne.s32.totalorder %s68, %s70
      %p74 = scmp.eq.s32.totalorder %s13, 0
      %p75 = por %p73, %p74
      %p76 = scmp.ne.s32.totalorder %s68, %s70
      %p77 = scmp.eq.s32.totalorder %s18, 1
      %p78 = por %p76, %p77
      %p79 = scmp.ne.s32.totalorder %s70, %s71
      %p80 = scmp.eq.s32.totalorder %s18, 0
      %p81 = por %p79, %p80
      %p82 = scmp.ne.s32.totalorder %s70, %s71
      %p83 = scmp.eq.s32.totalorder %s19, 1
      %p84 = por %p82, %p83
      %p86 = scmp.ne.s32.totalorder %s71, %s85
      %p87 = scmp.eq.s32.totalorder %s19, 0
      %p88 = por %p86, %p87
      %s90 = sadd.s32 %s89, 1
      %p93 = scmp.eq.s32.totalorder %s13, 1
      %p94 = scmp.ne.s32.totalorder %s89, %s91
      %p95 = scmp.eq.s32.totalorder %s13, 0
      %p96 = por %p94, %p95
      %p97 = scmp.ne.s32.totalorder %s89, %s91
      %p98 = scmp.eq.s32.totalorder %s18, 1
      %p99 = por %p97, %p98
      %p100 = scmp.ne.s32.totalorder %s91, %s92
      %p101 = scmp.eq.s32.totalorder %s18, 0
      %p102 = por %p100, %p101
      %p103 = scmp.ne.s32.totalorder %s91, %s92
      %p104 = scmp.eq.s32.totalorder %s19, 1
      %p105 = por %p103, %p104
      %p107 = scmp.ne.s32.totalorder %s92, %s106
      %p108 = scmp.eq.s32.totalorder %s19, 0
      %p109 = por %p107, %p108
      %s111 = sadd.s32 %s110, 1
      %p114 = scmp.eq.s32.totalorder %s13, 1
      %p115 = scmp.ne.s32.totalorder %s110, %s112
      %p116 = scmp.eq.s32.totalorder %s13, 0
      %p117 = por %p115, %p116
      %p118 = scmp.ne.s32.totalorder %s110, %s112
      %p119 = scmp.eq.s32.totalorder %s18, 1
      %p120 = por %p118, %p119
      %p121 = scmp.ne.s32.totalorder %s112, %s113
      %p122 = scmp.eq.s32.totalorder %s18, 0
      %p123 = por %p121, %p122
      %p124 = scmp.ne.s32.totalorder %s112, %s113
      %p125 = scmp.eq.s32.totalorder %s19, 1
      %p126 = por %p124, %p125
      %p128 = scmp.ne.s32.totalorder %s113, %s127
      %p129 = scmp.eq.s32.totalorder %s19, 0
      %p130 = por %p128, %p129
      %s132 = sadd.s32 %s131, 1
      %p135 = scmp.eq.s32.totalorder %s13, 1
      %p136 = scmp.ne.s32.totalorder %s131, %s133
      %p137 = scmp.eq.s32.totalorder %s13, 0
      %p138 = por %p136, %p137
      %p139 = scmp.ne.s32.totalorder %s131, %s133
      %p140 = scmp.eq.s32.totalorder %s18, 1
      %p141 = por %p139, %p140
      %p142 = scmp.ne.s32.totalorder %s133, %s134
      %p143 = scmp.eq.s32.totalorder %s18, 0
      %p144 = por %p142, %p143
      %p145 = scmp.ne.s32.totalorder %s133, %s134
      %p146 = scmp.eq.s32.totalorder %s19, 1
      %p147 = por %p145, %p146
      %p149 = scmp.ne.s32.totalorder %s134, %s148
      %p150 = scmp.eq.s32.totalorder %s19, 0
      %p151 = por %p149, %p150
      %s153 = sadd.s32 %s152, 1
      %p156 = scmp.eq.s32.totalorder %s13, 1
      %p157 = scmp.ne.s32.totalorder %s152, %s154
      %p158 = scmp.eq.s32.totalorder %s13, 0
      %p159 = por %p157, %p158
      %p160 = scmp.ne.s32.totalorder %s152, %s154
      %p161 = scmp.eq.s32.totalorder %s18, 1
      %p162 = por %p160, %p161
      %p163 = scmp.ne.s32.totalorder %s154, %s155
      %p164 = scmp.eq.s32.totalorder %s18, 0
      %p165 = por %p163, %p164
      %p166 = scmp.ne.s32.totalorder %s154, %s155
      %p167 = scmp.eq.s32.totalorder %s19, 1
      %p168 = por %p166, %p167
      %p170 = scmp.ne.s32.totalorder %s155, %s169
      %p171 = scmp.eq.s32.totalorder %s19, 0
      %p172 = por %p170, %p171
      %s173 = ssub.s32 %s13, %s20
      %p174 = scmp.eq.s32.totalorder %s173, 0
      %s176 = sadd.s32 %s175, 1
      %s177 = scalar_select %p174, %s175, %s176
      %p180 = pneg %p174
      %p181 = scmp.eq.s32.totalorder %s13, 1
      %p182 = por %p180, %p181
      %p183 = scmp.ne.s32.totalorder %s175, %s178
      %p184 = scmp.eq.s32.totalorder %s13, 0
      %p185 = por %p183, %p184
      %p186 = scmp.ne.s32.totalorder %s175, %s178
      %p187 = scmp.eq.s32.totalorder %s18, 1
      %p188 = por %p186, %p187
      %p189 = scmp.ne.s32.totalorder %s178, %s179
      %p190 = scmp.eq.s32.totalorder %s18, 0
      %p191 = por %p189, %p190
      %p192 = scmp.ne.s32.totalorder %s178, %s179
      %p193 = scmp.eq.s32.totalorder %s19, 1
      %p194 = por %p192, %p193
      %p196 = scmp.ne.s32.totalorder %s179, %s195
      %p197 = scmp.eq.s32.totalorder %s19, 0
      %p198 = por %p196, %p197
      %p199 = scmp.le.s32.totalorder 1, %s13
      %p200 = scmp.lt.s32.totalorder %s13, 3
      %p201 = pnand %p199, %p200
      %p202 = pneg %p201
      // Predicated region
      $region9: #{tpu_custom_call.1} parent=5 // pred_check
        _
      $region10: #{tpu_custom_call.1} parent=5 // pred_check_branch
        %204 = sbr.rel (%p201) target = $region12
      $region11: #{tpu_custom_call.1} parent=5 // pred_region
        %s205 = ssub.s32 %s13, 1
        // Predicated region
        $region13: #{tpu_custom_call.1} parent=11 // pred_check
          %p206 = pneg %p60
        $region14: #{tpu_custom_call.1} parent=11 // pred_check_branch
          %208 = sbr.rel (%p206) target = $region16
        $region15: #{tpu_custom_call.1} parent=11 // pred_region
          _
        $region16: #{tpu_custom_call.1} parent=11 // pred_fallthru
          _
        // Predicated region
        $region17: #{tpu_custom_call.1} parent=11 // pred_check
          %p209 = pneg %p81
        $region18: #{tpu_custom_call.1} parent=11 // pred_check_branch
          %211 = sbr.rel (%p209) target = $region20
        $region19: #{tpu_custom_call.1} parent=11 // pred_region
          _
        $region20: #{tpu_custom_call.1} parent=11 // pred_fallthru
          _
        // Predicated region
        $region21: #{tpu_custom_call.1} parent=11 // pred_check
          %p212 = pneg %p102
        $region22: #{tpu_custom_call.1} parent=11 // pred_check_branch
          %214 = sbr.rel (%p212) target = $region24
        $region23: #{tpu_custom_call.1} parent=11 // pred_region
          _
        $region24: #{tpu_custom_call.1} parent=11 // pred_fallthru
          _
        // Predicated region
        $region25: #{tpu_custom_call.1} parent=11 // pred_check
          %p215 = pneg %p123
        $region26: #{tpu_custom_call.1} parent=11 // pred_check_branch
          %217 = sbr.rel (%p215) target = $region28
        $region27: #{tpu_custom_call.1} parent=11 // pred_region
          _
        $region28: #{tpu_custom_call.1} parent=11 // pred_fallthru
          _
        // Predicated region
        $region29: #{tpu_custom_call.1} parent=11 // pred_check
          %p218 = pneg %p144
        $region30: #{tpu_custom_call.1} parent=11 // pred_check_branch
          %220 = sbr.rel (%p218) target = $region32
        $region31: #{tpu_custom_call.1} parent=11 // pred_region
          _
        $region32: #{tpu_custom_call.1} parent=11 // pred_fallthru
          _
        // Predicated region
        $region33: #{tpu_custom_call.1} parent=11 // pred_check
          %p221 = pneg %p165
        $region34: #{tpu_custom_call.1} parent=11 // pred_check_branch
          %223 = sbr.rel (%p221) target = $region36
        $region35: #{tpu_custom_call.1} parent=11 // pred_region
          _
        $region36: #{tpu_custom_call.1} parent=11 // pred_fallthru
          _
      $region12: #{tpu_custom_call.1} parent=5 // pred_fallthru
        _
      %p224 = scmp.lt.s32.totalorder %s13, 2
      // Predicated region
      $region37: #{tpu_custom_call.1} parent=5 // pred_check
        %p225 = pneg %p224
      $region38: #{tpu_custom_call.1} parent=5 // pred_check_branch
        %227 = sbr.rel (%p225) target = $region40
      $region39: #{tpu_custom_call.1} parent=5 // pred_region
        // Predicated region
        $region41: #{tpu_custom_call.1} parent=39 // pred_check
          %p228 = pneg %p33
        $region42: #{tpu_custom_call.1} parent=39 // pred_check_branch
          %230 = sbr.rel (%p228) target = $region44
        $region43: #{tpu_custom_call.1} parent=39 // pred_region
          %s231 = smul.u32 13, %s13
          %s232 = ssub.s32 25, %s231
          %p233 = scmp.lt.s32.totalorder %s232, 13
          %s234 = scalar_select %p233, %s232, 13
          %s235 = smul.u32 128, %s234
          %p236 = scmp.lt.s32.totalorder %s231, 24
          %s237 = scalar_select %p236, %s231, 24
          %s238 = smul.addr %s237, 8
          %s239 = scalar_lea.vmem %s0, %s238
          %s240 = smul.u32 13, %s13
          %s241 = ssub.s32 25, %s240
          %p242 = scmp.lt.s32.totalorder %s241, 13
          %s243 = scalar_select %p242, %s241, 13
          %s244 = smul.u32 128, %s243
        $region44: #{tpu_custom_call.1} parent=39 // pred_fallthru
          _
      $region40: #{tpu_custom_call.1} parent=5 // pred_fallthru
        _
      %p245 = scmp.le.s32.totalorder 1, %s13
      %p246 = scmp.lt.s32.totalorder %s13, 3
      %p247 = pnand %p245, %p246
      %p248 = pneg %p247
      // Predicated region
      $region45: #{tpu_custom_call.1} parent=5 // pred_check
        _
      $region46: #{tpu_custom_call.1} parent=5 // pred_check_branch
        %250 = sbr.rel (%p247) target = $region48
      $region47: #{tpu_custom_call.1} parent=5 // pred_region
        %s251 = ssub.s32 %s13, 1
        %s252 = smul.u32 13, %s18
        %s253 = ssub.s32 25, %s252
        %p254 = scmp.lt.s32.totalorder %s253, 13
        %s255 = scalar_select %p254, %s253, 13
        %s256 = smul.u32 128, %s255
        %p257 = scmp.lt.s32.totalorder %s252, 24
        %s258 = scalar_select %p257, %s252, 24
        %s259 = smul.addr %s258, 8
        %s260 = scalar_lea.vmem %s0, %s259
        %p261 = pneg %p39
        %p262 = pneg %p36
        %p263 = pneg %p60
        %p264 = pneg %p57
        %p265 = pneg %p81
        %p266 = pneg %p78
        %p267 = pneg %p102
        %p268 = pneg %p99
        %p269 = pneg %p123
        %p270 = pneg %p120
        %p271 = pneg %p144
        %p272 = pneg %p141
        %p273 = pneg %p165
        %p274 = pneg %p162
        %p275 = pneg %p191
        %p276 = pneg %p188
        %s277 = sand.u32 %s178, 1
        %s278 = sand.u32 %s178, 1
        %s279 = smul.addr %s278, 104
        %s280 = scalar_lea.vmem [#allocation2], %s279
        %s281 = smul.u32 13, %s18
        %s282 = ssub.s32 25, %s281
        %p283 = scmp.lt.s32.totalorder %s282, 13
        %s284 = scalar_select %p283, %s282, 13
        %s285 = smul.u32 128, %s284
        %p286 = scmp.lt.s32.totalorder %s281, 24
        %s287 = scalar_select %p286, %s281, 24
        %s288 = smul.addr %s287, 8
        %s289 = scalar_lea.vmem %s0, %s288
        %s290 = smul.u32 13, %s18
        %s291 = ssub.s32 25, %s290
        %p292 = scmp.lt.s32.totalorder %s291, 13
        %s293 = scalar_select %p292, %s291, 13
        %s294 = smul.u32 128, %s293
        %s295 = smul.u32 13, %s18
        %s296 = ssub.s32 25, %s295
        %p297 = scmp.lt.s32.totalorder %s296, 13
        %s298 = scalar_select %p297, %s296, 13
        %s299 = smul.u32 128, %s298
        %v300 = vld [vmem:[%s289] sm:$0xff]
        %v301 = vld [vmem:[%s289 + $0x8] sm:$0xff]
        %v302 = vld [vmem:[%s289 + $0x10] sm:$0xff]
        %v303 = vld [vmem:[%s289 + $0x18] sm:$0xff]
        %v304 = vld [vmem:[%s289 + $0x20] sm:$0xff]
        %v305 = vld [vmem:[%s289 + $0x28] sm:$0xff]
        %v306 = vld [vmem:[%s289 + $0x30] sm:$0xff]
        %v307 = vld [vmem:[%s289 + $0x38] sm:$0xff]
        %v308 = vld [vmem:[%s289 + $0x40] sm:$0xff]
        %v309 = vld [vmem:[%s289 + $0x48] sm:$0xff]
        %v310 = vld [vmem:[%s289 + $0x50] sm:$0xff]
        %v311 = vld [vmem:[%s289 + $0x58] sm:$0xff]
        %v312 = vld [vmem:[%s289 + $0x60] sm:$0xff]
        %v313 = vld [vmem:[%s1] sm:$0xff]
        %v314 = vld [vmem:[%s1 + $0x8] sm:$0xff]
        %v315 = vld [vmem:[%s1 + $0x10] sm:$0xff]
        %v316 = vld [vmem:[%s1 + $0x18] sm:$0xff]
        %v317 = vld [vmem:[%s2] sm:$0x1]
        %v319 = vlaneseq
        %v320 = vshrl.u32 %v319, 7
        %v321 = vsub.s32 0, %v320
        %v322 = vrot.slane %v317, %v321
        %vm324 = vcmask 261120
        %v326 = vsel %vm324, %v300, 0
        %v329 = vsel %vm324, %v301, 0
        %v332 = vsel %vm324, %v302, 0
        %v335 = vsel %vm324, %v303, 0
        %v338 = vsel %vm324, %v304, 0
        %v341 = vsel %vm324, %v305, 0
        %v344 = vsel %vm324, %v306, 0
        %v347 = vsel %vm324, %v307, 0
        %v350 = vsel %vm324, %v308, 0
        %v353 = vsel %vm324, %v309, 0
        %v356 = vsel %vm324, %v310, 0
        %v359 = vsel %vm324, %v311, 0
        %v362 = vsel %vm324, %v312, 0
        %364 = vmatprep.subr.mxu0 0.0
        %365 = vmatpush1.msra.mxu0 %v313
        %366 = vmatprep.subr.mxu0 0.0
        %367 = vmatpush1.msra.mxu0 %v314
        %368 = vmatprep.subr.mxu0 0.0
        %369 = vmatpush1.msra.mxu0 %v315
        %370 = vmatprep.subr.mxu0 0.0
        %371 = vmatpush1.msra.mxu0 %v316
        %372 = vmatprep.subr.mxu0 0.0
        %373 = vmatpush1.msra.mxu0 0.0
        %374 = vmatprep.subr.mxu0 0.0
        %375 = vmatpush1.msra.mxu0 0.0
        %376 = vmatprep.subr.mxu0 0.0
        %377 = vmatpush1.msra.mxu0 0.0
        %378 = vmatprep.subr.mxu0 0.0
        %379 = vmatpush1.msra.mxu0 0.0
        %380 = vmatprep.subr.mxu0 0.0
        %381 = vmatpush1.msra.mxu0 0.0
        %382 = vmatprep.subr.mxu0 0.0
        %383 = vmatpush1.msra.mxu0 0.0
        %384 = vmatprep.subr.mxu0 0.0
        %385 = vmatpush1.msra.mxu0 0.0
        %386 = vmatprep.subr.mxu0 0.0
        %387 = vmatpush1.msra.mxu0 0.0
        %388 = vmatprep.subr.mxu0 0.0
        %389 = vmatpush1.msra.mxu0 0.0
        %390 = vmatprep.subr.mxu0 0.0
        %391 = vmatpush1.msra.mxu0 0.0
        %392 = vmatprep.subr.mxu0 0.0
        %393 = vmatpush1.msra.mxu0 0.0
        %394 = vmatprep.subr.mxu0 0.0
        %395 = vmatpush1.msra.mxu0 0.0
        %396 = vmatprep.subr.mxu0 0.0
        %397 = vmatpush1.msra.mxu0 0.0
        %398 = vmatprep.subr.mxu0 0.0
        %399 = vmatpush1.msra.mxu0 0.0
        %400 = vmatprep.subr.mxu0 0.0
        %401 = vmatpush1.msra.mxu0 0.0
        %402 = vmatprep.subr.mxu0 0.0
        %403 = vmatpush1.msra.mxu0 0.0
        %404 = vmatprep.subr.mxu0 0.0
        %405 = vmatpush1.msra.mxu0 0.0
        %406 = vmatprep.subr.mxu0 0.0
        %407 = vmatpush1.msra.mxu0 0.0
        %408 = vmatprep.subr.mxu0 0.0
        %409 = vmatpush1.msra.mxu0 0.0
        %410 = vmatprep.subr.mxu0 0.0
        %411 = vmatpush1.msra.mxu0 0.0
        %412 = vmatprep.subr.mxu0 0.0
        %413 = vmatpush1.msra.mxu0 0.0
        %414 = vmatprep.subr.mxu0 0.0
        %415 = vmatpush1.msra.mxu0 0.0
        %416 = vmatprep.subr.mxu0 0.0
        %417 = vmatpush1.msra.mxu0 0.0
        %418 = vmatprep.subr.mxu0 0.0
        %419 = vmatpush1.msra.mxu0 0.0
        %420 = vmatprep.subr.mxu0 0.0
        %421 = vmatpush1.msra.mxu0 0.0
        %422 = vmatprep.subr.mxu0 0.0
        %423 = vmatpush1.msra.mxu0 0.0
        %424 = vmatprep.subr.mxu0 0.0
        %425 = vmatpush1.msra.mxu0 0.0
        %426 = vmatprep.subr.mxu0 0.0
        %427 = vmatpush1.msra.mxu0 0.0
        %428 = vmatprep.mubr.f32.mxu0 0.0
        %429 = vmatmul.mubr.f32.gmra.mrb[0].mxu0 %v326
        %v430 = vpop.f32.mrb[0].mxu0
        %v431 = vadd.f32 %v322, %v430
        %v432 = vpop.f32.mrb[0].mxu0
        %433 = vmatprep.mubr.f32.mxu0 0.0
        %434 = vmatmul.mubr.f32.gmra.mrb[0].mxu0 %v329
        %v435 = vpop.f32.mrb[0].mxu0
        %v436 = vadd.f32 %v322, %v435
        %v437 = vpop.f32.mrb[0].mxu0
        %438 = vmatprep.mubr.f32.mxu0 0.0
        %439 = vmatmul.mubr.f32.gmra.mrb[0].mxu0 %v332
        %v440 = vpop.f32.mrb[0].mxu0
        %v441 = vadd.f32 %v322, %v440
        %v442 = vpop.f32.mrb[0].mxu0
        %443 = vmatprep.mubr.f32.mxu0 0.0
        %444 = vmatmul.mubr.f32.gmra.mrb[0].mxu0 %v335
        %v445 = vpop.f32.mrb[0].mxu0
        %v446 = vadd.f32 %v322, %v445
        %v447 = vpop.f32.mrb[0].mxu0
        %448 = vmatprep.mubr.f32.mxu0 0.0
        %449 = vmatmul.mubr.f32.gmra.mrb[0].mxu0 %v338
        %v450 = vpop.f32.mrb[0].mxu0
        %v451 = vadd.f32 %v322, %v450
        %v452 = vpop.f32.mrb[0].mxu0
        %453 = vmatprep.mubr.f32.mxu0 0.0
        %454 = vmatmul.mubr.f32.gmra.mrb[0].mxu0 %v341
        %v455 = vpop.f32.mrb[0].mxu0
        %v456 = vadd.f32 %v322, %v455
        %v457 = vpop.f32.mrb[0].mxu0
        %458 = vmatprep.mubr.f32.mxu0 0.0
        %459 = vmatmul.mubr.f32.gmra.mrb[0].mxu0 %v344
        %v460 = vpop.f32.mrb[0].mxu0
        %v461 = vadd.f32 %v322, %v460
        %v462 = vpop.f32.mrb[0].mxu0
        %463 = vmatprep.mubr.f32.mxu0 0.0
        %464 = vmatmul.mubr.f32.gmra.mrb[0].mxu0 %v347
        %v465 = vpop.f32.mrb[0].mxu0
        %v466 = vadd.f32 %v322, %v465
        %v467 = vpop.f32.mrb[0].mxu0
        %468 = vmatprep.mubr.f32.mxu0 0.0
        %469 = vmatmul.mubr.f32.gmra.mrb[0].mxu0 %v350
        %v470 = vpop.f32.mrb[0].mxu0
        %v471 = vadd.f32 %v322, %v470
        %v472 = vpop.f32.mrb[0].mxu0
        %473 = vmatprep.mubr.f32.mxu0 0.0
        %474 = vmatmul.mubr.f32.gmra.mrb[0].mxu0 %v353
        %v475 = vpop.f32.mrb[0].mxu0
        %v476 = vadd.f32 %v322, %v475
        %v477 = vpop.f32.mrb[0].mxu0
        %478 = vmatprep.mubr.f32.mxu0 0.0
        %479 = vmatmul.mubr.f32.gmra.mrb[0].mxu0 %v356
        %v480 = vpop.f32.mrb[0].mxu0
        %v481 = vadd.f32 %v322, %v480
        %v482 = vpop.f32.mrb[0].mxu0
        %483 = vmatprep.mubr.f32.mxu0 0.0
        %484 = vmatmul.mubr.f32.gmra.mrb[0].mxu0 %v359
        %v485 = vpop.f32.mrb[0].mxu0
        %v486 = vadd.f32 %v322, %v485
        %v487 = vpop.f32.mrb[0].mxu0
        %488 = vmatprep.mubr.f32.mxu0 0.0
        %489 = vmatmul.mubr.f32.gmra.mrb[0].mxu0 %v362
        %v490 = vpop.f32.mrb[0].mxu0
        %v491 = vadd.f32 %v322, %v490
        %v492 = vpop.f32.mrb[0].mxu0
        %493 = vdwg.mxu0
        %v494 = vmax.f32 %v431, 0.0
        %v495 = vmax.f32 %v436, 0.0
        %v496 = vmax.f32 %v441, 0.0
        %v497 = vmax.f32 %v446, 0.0
        %v498 = vmax.f32 %v451, 0.0
        %v499 = vmax.f32 %v456, 0.0
        %v500 = vmax.f32 %v461, 0.0
        %v501 = vmax.f32 %v466, 0.0
        %v502 = vmax.f32 %v471, 0.0
        %v503 = vmax.f32 %v476, 0.0
        %v504 = vmax.f32 %v481, 0.0
        %v505 = vmax.f32 %v486, 0.0
        %v506 = vmax.f32 %v491, 0.0
        %v507 = vld [vmem:[%s3] sm:$0xff]
        %v508 = vld [vmem:[%s3 + $0x8] sm:$0xff]
        %v509 = vld [vmem:[%s3 + $0x10] sm:$0xff]
        %v510 = vld [vmem:[%s3 + $0x18] sm:$0xff]
        %v511 = vld [vmem:[%s4] sm:$0x1]
        %v513 = vlaneseq
        %v514 = vshrl.u32 %v513, 7
        %v515 = vsub.s32 0, %v514
        %v516 = vrot.slane %v511, %v515
        %v519 = vsel %vm324, %v494, 0
        %v522 = vsel %vm324, %v495, 0
        %v525 = vsel %vm324, %v496, 0
        %v528 = vsel %vm324, %v497, 0
        %v531 = vsel %vm324, %v498, 0
        %v534 = vsel %vm324, %v499, 0
        %v537 = vsel %vm324, %v500, 0
        %v540 = vsel %vm324, %v501, 0
        %v543 = vsel %vm324, %v502, 0
        %v546 = vsel %vm324, %v503, 0
        %v549 = vsel %vm324, %v504, 0
        %v552 = vsel %vm324, %v505, 0
        %v555 = vsel %vm324, %v506, 0
        %557 = vmatprep.subr.mxu0 0.0
        %558 = vmatpush1.msra.mxu0 %v507
        %559 = vmatprep.subr.mxu0 0.0
        %560 = vmatpush1.msra.mxu0 %v508
        %561 = vmatprep.subr.mxu0 0.0
        %562 = vmatpush1.msra.mxu0 %v509
        %563 = vmatprep.subr.mxu0 0.0
        %564 = vmatpush1.msra.mxu0 %v510
        %565 = vmatprep.subr.mxu0 0.0
        %566 = vmatpush1.msra.mxu0 0.0
        %567 = vmatprep.subr.mxu0 0.0
        %568 = vmatpush1.msra.mxu0 0.0
        %569 = vmatprep.subr.mxu0 0.0
        %570 = vmatpush1.msra.mxu0 0.0
        %571 = vmatprep.subr.mxu0 0.0
        %572 = vmatpush1.msra.mxu0 0.0
        %573 = vmatprep.subr.mxu0 0.0
        %574 = vmatpush1.msra.mxu0 0.0
        %575 = vmatprep.subr.mxu0 0.0
        %576 = vmatpush1.msra.mxu0 0.0
        %577 = vmatprep.subr.mxu0 0.0
        %578 = vmatpush1.msra.mxu0 0.0
        %579 = vmatprep.subr.mxu0 0.0
        %580 = vmatpush1.msra.mxu0 0.0
        %581 = vmatprep.subr.mxu0 0.0
        %582 = vmatpush1.msra.mxu0 0.0
        %583 = vmatprep.subr.mxu0 0.0
        %584 = vmatpush1.msra.mxu0 0.0
        %585 = vmatprep.subr.mxu0 0.0
        %586 = vmatpush1.msra.mxu0 0.0
        %587 = vmatprep.subr.mxu0 0.0
        %588 = vmatpush1.msra.mxu0 0.0
        %589 = vmatprep.subr.mxu0 0.0
        %590 = vmatpush1.msra.mxu0 0.0
        %591 = vmatprep.subr.mxu0 0.0
        %592 = vmatpush1.msra.mxu0 0.0
        %593 = vmatprep.subr.mxu0 0.0
        %594 = vmatpush1.msra.mxu0 0.0
        %595 = vmatprep.subr.mxu0 0.0
        %596 = vmatpush1.msra.mxu0 0.0
        %597 = vmatprep.subr.mxu0 0.0
        %598 = vmatpush1.msra.mxu0 0.0
        %599 = vmatprep.subr.mxu0 0.0
        %600 = vmatpush1.msra.mxu0 0.0
        %601 = vmatprep.subr.mxu0 0.0
        %602 = vmatpush1.msra.mxu0 0.0
        %603 = vmatprep.subr.mxu0 0.0
        %604 = vmatpush1.msra.mxu0 0.0
        %605 = vmatprep.subr.mxu0 0.0
        %606 = vmatpush1.msra.mxu0 0.0
        %607 = vmatprep.subr.mxu0 0.0
        %608 = vmatpush1.msra.mxu0 0.0
        %609 = vmatprep.subr.mxu0 0.0
        %610 = vmatpush1.msra.mxu0 0.0
        %611 = vmatprep.subr.mxu0 0.0
        %612 = vmatpush1.msra.mxu0 0.0
        %613 = vmatprep.subr.mxu0 0.0
        %614 = vmatpush1.msra.mxu0 0.0
        %615 = vmatprep.subr.mxu0 0.0
        %616 = vmatpush1.msra.mxu0 0.0
        %617 = vmatprep.subr.mxu0 0.0
        %618 = vmatpush1.msra.mxu0 0.0
        %619 = vmatprep.subr.mxu0 0.0
        %620 = vmatpush1.msra.mxu0 0.0
        %621 = vmatprep.mubr.f32.mxu0 0.0
        %622 = vmatmul.mubr.f32.gmra.mrb[0].mxu0 %v519
        %v623 = vpop.f32.mrb[0].mxu0
        %v624 = vadd.f32 %v516, %v623
        %v625 = vpop.f32.mrb[0].mxu0
        %626 = vmatprep.mubr.f32.mxu0 0.0
        %627 = vmatmul.mubr.f32.gmra.mrb[0].mxu0 %v522
        %v628 = vpop.f32.mrb[0].mxu0
        %v629 = vadd.f32 %v516, %v628
        %v630 = vpop.f32.mrb[0].mxu0
        %631 = vmatprep.mubr.f32.mxu0 0.0
        %632 = vmatmul.mubr.f32.gmra.mrb[0].mxu0 %v525
        %v633 = vpop.f32.mrb[0].mxu0
        %v634 = vadd.f32 %v516, %v633
        %v635 = vpop.f32.mrb[0].mxu0
        %636 = vmatprep.mubr.f32.mxu0 0.0
        %637 = vmatmul.mubr.f32.gmra.mrb[0].mxu0 %v528
        %v638 = vpop.f32.mrb[0].mxu0
        %v639 = vadd.f32 %v516, %v638
        %v640 = vpop.f32.mrb[0].mxu0
        %641 = vmatprep.mubr.f32.mxu0 0.0
        %642 = vmatmul.mubr.f32.gmra.mrb[0].mxu0 %v531
        %v643 = vpop.f32.mrb[0].mxu0
        %v644 = vadd.f32 %v516, %v643
        %v645 = vpop.f32.mrb[0].mxu0
        %646 = vmatprep.mubr.f32.mxu0 0.0
        %647 = vmatmul.mubr.f32.gmra.mrb[0].mxu0 %v534
        %v648 = vpop.f32.mrb[0].mxu0
        %v649 = vadd.f32 %v516, %v648
        %v650 = vpop.f32.mrb[0].mxu0
        %651 = vmatprep.mubr.f32.mxu0 0.0
        %652 = vmatmul.mubr.f32.gmra.mrb[0].mxu0 %v537
        %v653 = vpop.f32.mrb[0].mxu0
        %v654 = vadd.f32 %v516, %v653
        %v655 = vpop.f32.mrb[0].mxu0
        %656 = vmatprep.mubr.f32.mxu0 0.0
        %657 = vmatmul.mubr.f32.gmra.mrb[0].mxu0 %v540
        %v658 = vpop.f32.mrb[0].mxu0
        %v659 = vadd.f32 %v516, %v658
        %v660 = vpop.f32.mrb[0].mxu0
        %661 = vmatprep.mubr.f32.mxu0 0.0
        %662 = vmatmul.mubr.f32.gmra.mrb[0].mxu0 %v543
        %v663 = vpop.f32.mrb[0].mxu0
        %v664 = vadd.f32 %v516, %v663
        %v665 = vpop.f32.mrb[0].mxu0
        %666 = vmatprep.mubr.f32.mxu0 0.0
        %667 = vmatmul.mubr.f32.gmra.mrb[0].mxu0 %v546
        %v668 = vpop.f32.mrb[0].mxu0
        %v669 = vadd.f32 %v516, %v668
        %v670 = vpop.f32.mrb[0].mxu0
        %671 = vmatprep.mubr.f32.mxu0 0.0
        %672 = vmatmul.mubr.f32.gmra.mrb[0].mxu0 %v549
        %v673 = vpop.f32.mrb[0].mxu0
        %v674 = vadd.f32 %v516, %v673
        %v675 = vpop.f32.mrb[0].mxu0
        %676 = vmatprep.mubr.f32.mxu0 0.0
        %677 = vmatmul.mubr.f32.gmra.mrb[0].mxu0 %v552
        %v678 = vpop.f32.mrb[0].mxu0
        %v679 = vadd.f32 %v516, %v678
        %v680 = vpop.f32.mrb[0].mxu0
        %681 = vmatprep.mubr.f32.mxu0 0.0
        %682 = vmatmul.mubr.f32.gmra.mrb[0].mxu0 %v555
        %v683 = vpop.f32.mrb[0].mxu0
        %v684 = vadd.f32 %v516, %v683
        %v685 = vpop.f32.mrb[0].mxu0
        %686 = vdwg.mxu0
        %v687 = vmax.f32 %v624, 0.0
        %v688 = vmax.f32 %v629, 0.0
        %v689 = vmax.f32 %v634, 0.0
        %v690 = vmax.f32 %v639, 0.0
        %v691 = vmax.f32 %v644, 0.0
        %v692 = vmax.f32 %v649, 0.0
        %v693 = vmax.f32 %v654, 0.0
        %v694 = vmax.f32 %v659, 0.0
        %v695 = vmax.f32 %v664, 0.0
        %v696 = vmax.f32 %v669, 0.0
        %v697 = vmax.f32 %v674, 0.0
        %v698 = vmax.f32 %v679, 0.0
        %v699 = vmax.f32 %v684, 0.0
        %v700 = vld [vmem:[%s5] sm:$0xff]
        %v701 = vld [vmem:[%s5 + $0x8] sm:$0xff]
        %v702 = vld [vmem:[%s5 + $0x10] sm:$0xff]
        %v703 = vld [vmem:[%s5 + $0x18] sm:$0xff]
        %v704 = vld [vmem:[%s6] sm:$0x1]
        %v706 = vlaneseq
        %v707 = vshrl.u32 %v706, 7
        %v708 = vsub.s32 0, %v707
        %v709 = vrot.slane %v704, %v708
        %v712 = vsel %vm324, %v687, 0
        %v715 = vsel %vm324, %v688, 0
        %v718 = vsel %vm324, %v689, 0
        %v721 = vsel %vm324, %v690, 0
        %v724 = vsel %vm324, %v691, 0
        %v727 = vsel %vm324, %v692, 0
        %v730 = vsel %vm324, %v693, 0
        %v733 = vsel %vm324, %v694, 0
        %v736 = vsel %vm324, %v695, 0
        %v739 = vsel %vm324, %v696, 0
        %v742 = vsel %vm324, %v697, 0
        %v745 = vsel %vm324, %v698, 0
        %v748 = vsel %vm324, %v699, 0
        %750 = vmatprep.subr.mxu0 0.0
        %751 = vmatpush1.msra.mxu0 %v700
        %752 = vmatprep.subr.mxu0 0.0
        %753 = vmatpush1.msra.mxu0 %v701
        %754 = vmatprep.subr.mxu0 0.0
        %755 = vmatpush1.msra.mxu0 %v702
        %756 = vmatprep.subr.mxu0 0.0
        %757 = vmatpush1.msra.mxu0 %v703
        %758 = vmatprep.subr.mxu0 0.0
        %759 = vmatpush1.msra.mxu0 0.0
        %760 = vmatprep.subr.mxu0 0.0
        %761 = vmatpush1.msra.mxu0 0.0
        %762 = vmatprep.subr.mxu0 0.0
        %763 = vmatpush1.msra.mxu0 0.0
        %764 = vmatprep.subr.mxu0 0.0
        %765 = vmatpush1.msra.mxu0 0.0
        %766 = vmatprep.subr.mxu0 0.0
        %767 = vmatpush1.msra.mxu0 0.0
        %768 = vmatprep.subr.mxu0 0.0
        %769 = vmatpush1.msra.mxu0 0.0
        %770 = vmatprep.subr.mxu0 0.0
        %771 = vmatpush1.msra.mxu0 0.0
        %772 = vmatprep.subr.mxu0 0.0
        %773 = vmatpush1.msra.mxu0 0.0
        %774 = vmatprep.subr.mxu0 0.0
        %775 = vmatpush1.msra.mxu0 0.0
        %776 = vmatprep.subr.mxu0 0.0
        %777 = vmatpush1.msra.mxu0 0.0
        %778 = vmatprep.subr.mxu0 0.0
        %779 = vmatpush1.msra.mxu0 0.0
        %780 = vmatprep.subr.mxu0 0.0
        %781 = vmatpush1.msra.mxu0 0.0
        %782 = vmatprep.subr.mxu0 0.0
        %783 = vmatpush1.msra.mxu0 0.0
        %784 = vmatprep.subr.mxu0 0.0
        %785 = vmatpush1.msra.mxu0 0.0
        %786 = vmatprep.subr.mxu0 0.0
        %787 = vmatpush1.msra.mxu0 0.0
        %788 = vmatprep.subr.mxu0 0.0
        %789 = vmatpush1.msra.mxu0 0.0
        %790 = vmatprep.subr.mxu0 0.0
        %791 = vmatpush1.msra.mxu0 0.0
        %792 = vmatprep.subr.mxu0 0.0
        %793 = vmatpush1.msra.mxu0 0.0
        %794 = vmatprep.subr.mxu0 0.0
        %795 = vmatpush1.msra.mxu0 0.0
        %796 = vmatprep.subr.mxu0 0.0
        %797 = vmatpush1.msra.mxu0 0.0
        %798 = vmatprep.subr.mxu0 0.0
        %799 = vmatpush1.msra.mxu0 0.0
        %800 = vmatprep.subr.mxu0 0.0
        %801 = vmatpush1.msra.mxu0 0.0
        %802 = vmatprep.subr.mxu0 0.0
        %803 = vmatpush1.msra.mxu0 0.0
        %804 = vmatprep.subr.mxu0 0.0
        %805 = vmatpush1.msra.mxu0 0.0
        %806 = vmatprep.subr.mxu0 0.0
        %807 = vmatpush1.msra.mxu0 0.0
        %808 = vmatprep.subr.mxu0 0.0
        %809 = vmatpush1.msra.mxu0 0.0
        %810 = vmatprep.subr.mxu0 0.0
        %811 = vmatpush1.msra.mxu0 0.0
        %812 = vmatprep.subr.mxu0 0.0
        %813 = vmatpush1.msra.mxu0 0.0
        %814 = vmatprep.mubr.f32.mxu0 0.0
        %815 = vmatmul.mubr.f32.gmra.mrb[0].mxu0 %v712
        %v816 = vpop.f32.mrb[0].mxu0
        %v817 = vadd.f32 %v709, %v816
        %v818 = vpop.f32.mrb[0].mxu0
        %819 = vmatprep.mubr.f32.mxu0 0.0
        %820 = vmatmul.mubr.f32.gmra.mrb[0].mxu0 %v715
        %v821 = vpop.f32.mrb[0].mxu0
        %v822 = vadd.f32 %v709, %v821
        %v823 = vpop.f32.mrb[0].mxu0
        %824 = vmatprep.mubr.f32.mxu0 0.0
        %825 = vmatmul.mubr.f32.gmra.mrb[0].mxu0 %v718
        %v826 = vpop.f32.mrb[0].mxu0
        %v827 = vadd.f32 %v709, %v826
        %v828 = vpop.f32.mrb[0].mxu0
        %829 = vmatprep.mubr.f32.mxu0 0.0
        %830 = vmatmul.mubr.f32.gmra.mrb[0].mxu0 %v721
        %v831 = vpop.f32.mrb[0].mxu0
        %v832 = vadd.f32 %v709, %v831
        %v833 = vpop.f32.mrb[0].mxu0
        %834 = vmatprep.mubr.f32.mxu0 0.0
        %835 = vmatmul.mubr.f32.gmra.mrb[0].mxu0 %v724
        %v836 = vpop.f32.mrb[0].mxu0
        %v837 = vadd.f32 %v709, %v836
        %v838 = vpop.f32.mrb[0].mxu0
        %839 = vmatprep.mubr.f32.mxu0 0.0
        %840 = vmatmul.mubr.f32.gmra.mrb[0].mxu0 %v727
        %v841 = vpop.f32.mrb[0].mxu0
        %v842 = vadd.f32 %v709, %v841
        %v843 = vpop.f32.mrb[0].mxu0
        %844 = vmatprep.mubr.f32.mxu0 0.0
        %845 = vmatmul.mubr.f32.gmra.mrb[0].mxu0 %v730
        %v846 = vpop.f32.mrb[0].mxu0
        %v847 = vadd.f32 %v709, %v846
        %v848 = vpop.f32.mrb[0].mxu0
        %849 = vmatprep.mubr.f32.mxu0 0.0
        %850 = vmatmul.mubr.f32.gmra.mrb[0].mxu0 %v733
        %v851 = vpop.f32.mrb[0].mxu0
        %v852 = vadd.f32 %v709, %v851
        %v853 = vpop.f32.mrb[0].mxu0
        %854 = vmatprep.mubr.f32.mxu0 0.0
        %855 = vmatmul.mubr.f32.gmra.mrb[0].mxu0 %v736
        %v856 = vpop.f32.mrb[0].mxu0
        %v857 = vadd.f32 %v709, %v856
        %v858 = vpop.f32.mrb[0].mxu0
        %859 = vmatprep.mubr.f32.mxu0 0.0
        %860 = vmatmul.mubr.f32.gmra.mrb[0].mxu0 %v739
        %v861 = vpop.f32.mrb[0].mxu0
        %v862 = vadd.f32 %v709, %v861
        %v863 = vpop.f32.mrb[0].mxu0
        %864 = vmatprep.mubr.f32.mxu0 0.0
        %865 = vmatmul.mubr.f32.gmra.mrb[0].mxu0 %v742
        %v866 = vpop.f32.mrb[0].mxu0
        %v867 = vadd.f32 %v709, %v866
        %v868 = vpop.f32.mrb[0].mxu0
        %869 = vmatprep.mubr.f32.mxu0 0.0
        %870 = vmatmul.mubr.f32.gmra.mrb[0].mxu0 %v745
        %v871 = vpop.f32.mrb[0].mxu0
        %v872 = vadd.f32 %v709, %v871
        %v873 = vpop.f32.mrb[0].mxu0
        %874 = vmatprep.mubr.f32.mxu0 0.0
        %875 = vmatmul.mubr.f32.gmra.mrb[0].mxu0 %v748
        %v876 = vpop.f32.mrb[0].mxu0
        %v877 = vadd.f32 %v709, %v876
        %v878 = vpop.f32.mrb[0].mxu0
        %879 = vdwg.mxu0
        %vm880 = vcmask 23552
        %881 = vst.msk [vmem:[%s280] sm:$0xff] %vm880, %v817
        %882 = vst.msk [vmem:[%s280 + $0x8] sm:$0xff] %vm880, %v822
        %883 = vst.msk [vmem:[%s280 + $0x10] sm:$0xff] %vm880, %v827
        %884 = vst.msk [vmem:[%s280 + $0x18] sm:$0xff] %vm880, %v832
        %885 = vst.msk [vmem:[%s280 + $0x20] sm:$0xff] %vm880, %v837
        %886 = vst.msk [vmem:[%s280 + $0x28] sm:$0xff] %vm880, %v842
        %887 = vst.msk [vmem:[%s280 + $0x30] sm:$0xff] %vm880, %v847
        %888 = vst.msk [vmem:[%s280 + $0x38] sm:$0xff] %vm880, %v852
        %889 = vst.msk [vmem:[%s280 + $0x40] sm:$0xff] %vm880, %v857
        %890 = vst.msk [vmem:[%s280 + $0x48] sm:$0xff] %vm880, %v862
        %891 = vst.msk [vmem:[%s280 + $0x50] sm:$0xff] %vm880, %v867
        %892 = vst.msk [vmem:[%s280 + $0x58] sm:$0xff] %vm880, %v872
        %893 = vst.msk [vmem:[%s280 + $0x60] sm:$0xff] %vm880, %v877
        %s894 = sand.u32 %s178, 1
        %s895 = sand.u32 %s178, 1
        %s896 = smul.addr %s895, 104
        %s897 = scalar_lea.vmem [#allocation2], %s896
        // Predicated region
        $region49: #{tpu_custom_call.1} parent=47 // pred_check
          %p898 = pneg %p188
        $region50: #{tpu_custom_call.1} parent=47 // pred_check_branch
          %900 = sbr.rel (%p898) target = $region52
        $region51: #{tpu_custom_call.1} parent=47 // pred_region
          %s901 = smul.u32 13, %s18
          %s902 = ssub.s32 25, %s901
          %p903 = scmp.lt.s32.totalorder %s902, 13
          %s904 = scalar_select %p903, %s902, 13
          %s905 = smul.u32 128, %s904
          %p906 = scmp.ne.s32.totalorder 0, %s905
          %s907 = smul.addr %s901, 8
          %s908 = scalar_lea.vmem %s7, %s907
          // Predicated region
          $region53: #{tpu_custom_call.1} parent=51 // pred_check
            %p909 = pneg %p906
          $region54: #{tpu_custom_call.1} parent=51 // pred_check_branch
            %911 = sbr.rel (%p909) target = $region56
          $region55: #{tpu_custom_call.1} parent=51 // pred_region
            // Predicated region
            $region57: #{tpu_custom_call.1} parent=55 // pred_check
              _
            $region58: #{tpu_custom_call.1} parent=55 // pred_check_branch
              %913 = sbr.rel (0) target = $region60
            $region59: #{tpu_custom_call.1} parent=55 // pred_region
              // Predicated region
              $region79: #{tpu_custom_call.1} parent=59 // pred_check
                _
              $region80: #{tpu_custom_call.1} parent=59 // pred_check_branch
                %987 = sbr.rel (0) target = $region82
              $region81: #{tpu_custom_call.1} parent=59 // pred_region
                %s988 = sdiv.u32.pop %s904, 13
                %s989 = srem.u32.pop %s904, 13
                // While loop
                $region83: #{tpu_custom_call.1} parent=81 // loop_pre_header
                  _
                $region84: #{tpu_custom_call.1} parent=81 // loop_header
                  %s991 = sphi 0, %s993
                  %p992 = scmp.ge.s32.totalorder %s991, %s988
                  %s996 = sphi 0, %s1027
                  %s997 = sphi %s897, %s1030
                  %s998 = sphi %s908, %s1031
                $region85: #{tpu_custom_call.1} parent=81 // loop_header_branch
                  %995 = sbr.rel (%p992) target = $region89
                $region86: #{tpu_custom_call.1} parent=81 // loop_body
                  %v999 = vld [vmem:[%s997] sm:$0xff]
                  %1000 = vst [vmem:[%s998] sm:$0xff] %v999
                  %v1001 = vld [vmem:[%s997 + $0x8] sm:$0xff]
                  %1002 = vst [vmem:[%s998 + $0x8] sm:$0xff] %v1001
                  %v1003 = vld [vmem:[%s997 + $0x10] sm:$0xff]
                  %1004 = vst [vmem:[%s998 + $0x10] sm:$0xff] %v1003
                  %v1005 = vld [vmem:[%s997 + $0x18] sm:$0xff]
                  %1006 = vst [vmem:[%s998 + $0x18] sm:$0xff] %v1005
                  %v1007 = vld [vmem:[%s997 + $0x20] sm:$0xff]
                  %1008 = vst [vmem:[%s998 + $0x20] sm:$0xff] %v1007
                  %v1009 = vld [vmem:[%s997 + $0x28] sm:$0xff]
                  %1010 = vst [vmem:[%s998 + $0x28] sm:$0xff] %v1009
                  %v1011 = vld [vmem:[%s997 + $0x30] sm:$0xff]
                  %1012 = vst [vmem:[%s998 + $0x30] sm:$0xff] %v1011
                  %v1013 = vld [vmem:[%s997 + $0x38] sm:$0xff]
                  %1014 = vst [vmem:[%s998 + $0x38] sm:$0xff] %v1013
                  %v1015 = vld [vmem:[%s997 + $0x40] sm:$0xff]
                  %1016 = vst [vmem:[%s998 + $0x40] sm:$0xff] %v1015
                  %v1017 = vld [vmem:[%s997 + $0x48] sm:$0xff]
                  %1018 = vst [vmem:[%s998 + $0x48] sm:$0xff] %v1017
                  %v1019 = vld [vmem:[%s997 + $0x50] sm:$0xff]
                  %1020 = vst [vmem:[%s998 + $0x50] sm:$0xff] %v1019
                  %v1021 = vld [vmem:[%s997 + $0x58] sm:$0xff]
                  %1022 = vst [vmem:[%s998 + $0x58] sm:$0xff] %v1021
                  %v1023 = vld [vmem:[%s997 + $0x60] sm:$0xff]
                  %1024 = vst [vmem:[%s998 + $0x60] sm:$0xff] %v1023
                  %s1025 = sadd.s32 1, %s996
                  %p1026 = scmp.ge.s32.totalorder %s1025, %s988
                  %s1027 = scalar_select %p1026, 0, %s1025
                  %s1028 = smul.u32 %s1027, 104
                  %s1029 = smul.u32 %s1027, 104
                  %s1030 = scalar_lea.vmem %s897, %s1028 [#allocation2]
                  %s1031 = scalar_lea.vmem %s908, %s1029
                $region87: #{tpu_custom_call.1} parent=81 // loop_footer
                  %s993 = sadd.s32 %s991, 1
                $region88: #{tpu_custom_call.1} parent=81 // loop_footer_branch
                  %990 = sbr.rel target = $region84
                $region89: #{tpu_custom_call.1} parent=81 // loop_exit
                  _
                %s1032 = sdiv.u32.pop %s904, 13
                %s1033 = srem.u32.pop %s904, 13
                %s1034 = smul.u32 %s1032, 13
                %s1035 = smul.u32 8, %s1034
                %s1036 = scalar_lea.vmem %s897, %s1035 [#allocation2]
                %s1037 = smul.u32 8, %s1034
                %s1038 = scalar_lea.vmem %s908, %s1037
                // While loop
                $region90: #{tpu_custom_call.1} parent=81 // loop_pre_header
                  _
                $region91: #{tpu_custom_call.1} parent=81 // loop_header
                  %s1040 = sphi 0, %s1042
                  %p1041 = scmp.ge.s32.totalorder %s1040, %s1033
                  %s1045 = sphi 0, %s1052
                  %s1046 = sphi %s1036, %s1055
                  %s1047 = sphi %s1038, %s1056
                $region92: #{tpu_custom_call.1} parent=81 // loop_header_branch
                  %1044 = sbr.rel (%p1041) target = $region96
                $region93: #{tpu_custom_call.1} parent=81 // loop_body
                  %v1048 = vld [vmem:[%s1046] sm:$0xff]
                  %1049 = vst [vmem:[%s1047] sm:$0xff] %v1048
                  %s1050 = sadd.s32 1, %s1045
                  %p1051 = scmp.ge.s32.totalorder %s1050, %s1033
                  %s1052 = scalar_select %p1051, 0, %s1050
                  %s1053 = smul.u32 %s1052, 8
                  %s1054 = smul.u32 %s1052, 8
                  %s1055 = scalar_lea.vmem %s1036, %s1053 [#allocation2]
                  %s1056 = scalar_lea.vmem %s1038, %s1054
                $region94: #{tpu_custom_call.1} parent=81 // loop_footer
                  %s1042 = sadd.s32 %s1040, 1
                $region95: #{tpu_custom_call.1} parent=81 // loop_footer_branch
                  %1039 = sbr.rel target = $region91
                $region96: #{tpu_custom_call.1} parent=81 // loop_exit
                  _
              $region82: #{tpu_custom_call.1} parent=59 // pred_fallthru
                _
              // Predicated region
              $region97: #{tpu_custom_call.1} parent=59 // pred_check
                _
              $region98: #{tpu_custom_call.1} parent=59 // pred_check_branch
                %1058 = sbr.rel target = $region100
              $region99: #{tpu_custom_call.1} parent=59 // pred_region
                _
              $region100: #{tpu_custom_call.1} parent=59 // pred_fallthru
                _
            $region60: #{tpu_custom_call.1} parent=55 // pred_fallthru
              _
            // Predicated region
            $region61: #{tpu_custom_call.1} parent=55 // pred_check
              _
            $region62: #{tpu_custom_call.1} parent=55 // pred_check_branch
              %915 = sbr.rel target = $region64
            $region63: #{tpu_custom_call.1} parent=55 // pred_region
              %s917 = sdiv.u32.pop %s904, 13
              %s918 = srem.u32.pop %s904, 13
              // While loop
              $region65: #{tpu_custom_call.1} parent=63 // loop_pre_header
                _
              $region66: #{tpu_custom_call.1} parent=63 // loop_header
                %s920 = sphi 0, %s922
                %p921 = scmp.ge.s32.totalorder %s920, %s917
                %s925 = sphi 0, %s956
                %s926 = sphi %s897, %s959
                %s927 = sphi %s908, %s960
              $region67: #{tpu_custom_call.1} parent=63 // loop_header_branch
                %924 = sbr.rel (%p921) target = $region71
              $region68: #{tpu_custom_call.1} parent=63 // loop_body
                %v928 = vld [vmem:[%s926] sm:$0xff]
                %929 = vst [vmem:[%s927] sm:$0xff] %v928
                %v930 = vld [vmem:[%s926 + $0x8] sm:$0xff]
                %931 = vst [vmem:[%s927 + $0x8] sm:$0xff] %v930
                %v932 = vld [vmem:[%s926 + $0x10] sm:$0xff]
                %933 = vst [vmem:[%s927 + $0x10] sm:$0xff] %v932
                %v934 = vld [vmem:[%s926 + $0x18] sm:$0xff]
                %935 = vst [vmem:[%s927 + $0x18] sm:$0xff] %v934
                %v936 = vld [vmem:[%s926 + $0x20] sm:$0xff]
                %937 = vst [vmem:[%s927 + $0x20] sm:$0xff] %v936
                %v938 = vld [vmem:[%s926 + $0x28] sm:$0xff]
                %939 = vst [vmem:[%s927 + $0x28] sm:$0xff] %v938
                %v940 = vld [vmem:[%s926 + $0x30] sm:$0xff]
                %941 = vst [vmem:[%s927 + $0x30] sm:$0xff] %v940
                %v942 = vld [vmem:[%s926 + $0x38] sm:$0xff]
                %943 = vst [vmem:[%s927 + $0x38] sm:$0xff] %v942
                %v944 = vld [vmem:[%s926 + $0x40] sm:$0xff]
                %945 = vst [vmem:[%s927 + $0x40] sm:$0xff] %v944
                %v946 = vld [vmem:[%s926 + $0x48] sm:$0xff]
                %947 = vst [vmem:[%s927 + $0x48] sm:$0xff] %v946
                %v948 = vld [vmem:[%s926 + $0x50] sm:$0xff]
                %949 = vst [vmem:[%s927 + $0x50] sm:$0xff] %v948
                %v950 = vld [vmem:[%s926 + $0x58] sm:$0xff]
                %951 = vst [vmem:[%s927 + $0x58] sm:$0xff] %v950
                %v952 = vld [vmem:[%s926 + $0x60] sm:$0xff]
                %953 = vst [vmem:[%s927 + $0x60] sm:$0xff] %v952
                %s954 = sadd.s32 1, %s925
                %p955 = scmp.ge.s32.totalorder %s954, %s917
                %s956 = scalar_select %p955, 0, %s954
                %s957 = smul.u32 %s956, 104
                %s958 = smul.u32 %s956, 104
                %s959 = scalar_lea.vmem %s897, %s957 [#allocation2]
                %s960 = scalar_lea.vmem %s908, %s958
              $region69: #{tpu_custom_call.1} parent=63 // loop_footer
                %s922 = sadd.s32 %s920, 1
              $region70: #{tpu_custom_call.1} parent=63 // loop_footer_branch
                %919 = sbr.rel target = $region66
              $region71: #{tpu_custom_call.1} parent=63 // loop_exit
                _
              %s961 = sdiv.u32.pop %s904, 13
              %s962 = srem.u32.pop %s904, 13
              %s963 = smul.u32 %s961, 13
              %s964 = smul.u32 8, %s963
              %s965 = scalar_lea.vmem %s897, %s964 [#allocation2]
              %s966 = smul.u32 8, %s963
              %s967 = scalar_lea.vmem %s908, %s966
              // While loop
              $region72: #{tpu_custom_call.1} parent=63 // loop_pre_header
                _
              $region73: #{tpu_custom_call.1} parent=63 // loop_header
                %s969 = sphi 0, %s971
                %p970 = scmp.ge.s32.totalorder %s969, %s962
                %s974 = sphi 0, %s981
                %s975 = sphi %s965, %s984
                %s976 = sphi %s967, %s985
              $region74: #{tpu_custom_call.1} parent=63 // loop_header_branch
                %973 = sbr.rel (%p970) target = $region78
              $region75: #{tpu_custom_call.1} parent=63 // loop_body
                %v977 = vld [vmem:[%s975] sm:$0xff]
                %978 = vst [vmem:[%s976] sm:$0xff] %v977
                %s979 = sadd.s32 1, %s974
                %p980 = scmp.ge.s32.totalorder %s979, %s962
                %s981 = scalar_select %p980, 0, %s979
                %s982 = smul.u32 %s981, 8
                %s983 = smul.u32 %s981, 8
                %s984 = scalar_lea.vmem %s965, %s982 [#allocation2]
                %s985 = scalar_lea.vmem %s967, %s983
              $region76: #{tpu_custom_call.1} parent=63 // loop_footer
                %s971 = sadd.s32 %s969, 1
              $region77: #{tpu_custom_call.1} parent=63 // loop_footer_branch
                %968 = sbr.rel target = $region73
              $region78: #{tpu_custom_call.1} parent=63 // loop_exit
                _
            $region64: #{tpu_custom_call.1} parent=55 // pred_fallthru
              _
          $region56: #{tpu_custom_call.1} parent=51 // pred_fallthru
            _
          %1059 = vnop
        $region52: #{tpu_custom_call.1} parent=47 // pred_fallthru
          _
      $region48: #{tpu_custom_call.1} parent=5 // pred_fallthru
        _
      %p1060 = scmp.le.s32.totalorder 2, %s13
      // Predicated region
      $region101: #{tpu_custom_call.1} parent=5 // pred_check
        %p1061 = pneg %p1060
      $region102: #{tpu_custom_call.1} parent=5 // pred_check_branch
        %1063 = sbr.rel (%p1061) target = $region104
      $region103: #{tpu_custom_call.1} parent=5 // pred_region
        %s1064 = ssub.s32 %s13, 2
        // Predicated region
        $region105: #{tpu_custom_call.1} parent=103 // pred_check
          %p1065 = pneg %p194
        $region106: #{tpu_custom_call.1} parent=103 // pred_check_branch
          %1067 = sbr.rel (%p1065) target = $region108
        $region107: #{tpu_custom_call.1} parent=103 // pred_region
          %s1068 = sand.u32 %s179, 1
          %s1069 = sand.u32 %s179, 1
          %s1070 = smul.addr %s1069, 104
          %s1071 = scalar_lea.vmem [#allocation2], %s1070
        $region108: #{tpu_custom_call.1} parent=103 // pred_fallthru
          _
      $region104: #{tpu_custom_call.1} parent=5 // pred_fallthru
        _
    $region6: #{tpu_custom_call.1} parent=1 // loop_footer
      %s17 = sadd.s32 1, %s13
    $region7: #{tpu_custom_call.1} parent=1 // loop_footer_branch
      %12 = sbr.rel target = $region3
    $region8: #{tpu_custom_call.1} parent=1 // loop_exit
      _

</llo_original>
